<compile_context>
chip_gen: v5e
topology: v5e:2x2
jax: 0.10.0
libtpu: 0.0.40
codegen_flags: <defaults>
</compile_context>

<pallas_src>
import jax
import jax.numpy as jnp
import numpy as np
from jax.experimental import pallas as pl
from jax.experimental.pallas import tpu as pltpu

# ---- static problem sizes (the module's fc(32, 1) implies 16 * L3 == 32 -> L_IN == 16) ----
B = 2
L_IN, C_IN = 16, 6
C1, K1, S1 = 20, 3, 2
C2, K2, S2 = 30, 3, 2
C3, K3, S3 = 16, 2, 1
L1 = (L_IN - K1) // S1 + 1   # 7
L2 = (L1 - K2) // S2 + 1     # 3
L3 = (L2 - K3) // S3 + 1     # 2
EPS = 1e-5

RB = 8                 # rows per batch in the padded row layout
NR = B * RB            # 16 working rows
BLK = 128              # per-tap lane block width in the packed weights (no lane rotations)
T1_ORDER = [0, 2, 4, 6, 1, 3, 5]   # conv1 output times, parity-split (even first, then odd)

# slab row offsets (all multiples of 8) and size
W1_ROW, W2_ROW, W3_ROW, P_ROW = 0, 24, 48, 80
SLAB_ROWS, SLAB_COLS = 88, K2 * BLK

# row-layout invariants (load-bearing: every tap read must stay inside one 8-row batch block)
assert L1 + 1 <= RB                       # 7 valid conv1 rows + 1 pad row per batch block
assert (L1 + 1) // 2 + (L2 - 1) < RB      # conv2 odd-tap offset (+4) stays inside the block
assert (L2 - 1) + 1 <= (L1 + 1) // 2      # conv2 even +1 tap lands on a valid even slot
assert (L3 - 1) + (K3 - 1) < L2 <= RB     # conv3 +1 tap stays on valid conv2 rows


def wrenchnet_kernel(x_ref, s_ref, o_ref):
    f32 = jnp.float32

    # constant row masks for the BatchNorm statistics (built once; valid rows per 8-row block)
    j = jax.lax.rem(jax.lax.broadcasted_iota(jnp.int32, (NR, 1), 0), RB)
    mask1 = (j < L1).astype(f32)     # conv1: 7 valid rows per batch -> 14 total
    mask2 = (j < L2).astype(f32)     # conv2: 3 valid rows per batch ->  6 total

    def bn(h, mask, count, gamma, beta):
        # training-mode BatchNorm1d: per-channel stats over the valid (batch*length) rows,
        # biased variance, two-pass (subtract the mean before squaring).
        mean = jnp.sum(h * mask, axis=0, keepdims=True) * (1.0 / count)
        d = (h - mean) * mask
        var = jnp.sum(d * d, axis=0, keepdims=True) * (1.0 / count)
        return (h - mean) * jax.lax.rsqrt(var + EPS) * gamma + beta

    # packed parameters: single slab, row offsets multiples of 8, lane offsets 0/128/256
    w1 = s_ref[W1_ROW:W1_ROW + K1 * C_IN, 0:C1]          # (18, 20)
    w2 = s_ref[W2_ROW:W2_ROW + C1, :]                    # (20, 384)  one 128-wide block/tap
    w3 = s_ref[W3_ROW:W3_ROW + C2, 0:K3 * BLK]           # (30, 256)
    b1  = s_ref[P_ROW + 0:P_ROW + 1, 0:C1]
    g1  = s_ref[P_ROW + 1:P_ROW + 2, 0:C1]
    be1 = s_ref[P_ROW + 2:P_ROW + 3, 0:C1]
    b2  = s_ref[P_ROW + 3:P_ROW + 4, 0:BLK]
    g2  = s_ref[P_ROW + 4:P_ROW + 5, 0:BLK]
    be2 = s_ref[P_ROW + 5:P_ROW + 6, 0:BLK]
    b3  = s_ref[P_ROW + 6:P_ROW + 7, 0:BLK]

    # ---- layer1: Conv1d(6->20, k=3, s=2) + ReLU + BN -- one matmul on the im2col'd input ----
    h1 = jnp.dot(x_ref[...], w1, preferred_element_type=f32) + b1          # (16, 20)
    h1 = bn(jnp.maximum(h1, 0.0), mask1, float(B * L1), g1, be1)

    # ---- layer2: Conv1d(20->30, k=3, s=2) + ReLU + BN ----
    # parity-split h1 rows put the three stride-2 taps at constant row offsets 0, +4, +1,
    # so the tap sum is three lane-aligned 128-wide blocks plus two constant row-rolls.
    z2 = jnp.dot(h1, w2, preferred_element_type=f32)                       # (16, 384)
    h2 = (z2[:, 0:BLK]
          + jnp.roll(z2[:, BLK:2 * BLK], -(RB // 2), axis=0)
          + jnp.roll(z2[:, 2 * BLK:3 * BLK], -1, axis=0))                  # (16, 128), ch 0..29
    h2 = bn(jnp.maximum(h2 + b2, 0.0), mask2, float(B * L2), g2, be2)

    # ---- layer3: Conv1d(30->16, k=2, s=1), no activation; taps at row offsets 0, +1 ----
    z3 = jnp.dot(h2[:, 0:C2], w3, preferred_element_type=f32)              # (16, 256)
    y3 = z3[:, 0:BLK] + jnp.roll(z3[:, BLK:2 * BLK], -1, axis=0) + b3      # (16, 128), ch 0..15

    # single unmasked full-ref store; valid rows are j in {0, 1} of each 8-row batch block
    o_ref[...] = y3


def pack_wrenchnet_params(params):
    """One-time repack of the natural (PyTorch-layout) parameters into a single f32 slab."""
    w1, b1, g1, be1, w2, b2, g2, be2, w3, b3 = params
    slab = np.zeros((SLAB_ROWS, SLAB_COLS), np.float32)
    # conv1 weight, taps flattened along the contraction dim: row index k*C_IN + cin
    slab[W1_ROW:W1_ROW + K1 * C_IN, 0:C1] = np.asarray(w1, np.float32).reshape(K1 * C_IN, C1)
    # conv2 / conv3 weights: one 128-lane block per tap (lane offsets are multiples of 128)
    for k in range(K2):
        slab[W2_ROW:W2_ROW + C1, k * BLK:k * BLK + C2] = np.asarray(w2[k], np.float32)
    for k in range(K3):
        slab[W3_ROW:W3_ROW + C2, k * BLK:k * BLK + C3] = np.asarray(w3[k], np.float32)
    # per-channel vectors, one slab row each (zero-padded lanes are harmless by construction)
    for r, v in enumerate((b1, g1, be1, b2, g2, be2, b3)):
        vv = np.asarray(v, np.float32).reshape(-1)
        slab[P_ROW + r, :vv.shape[0]] = vv
    return jnp.asarray(slab)


@jax.jit
def wrenchnet_forward(x_ncl, slab):
    """x_ncl: (B, C_IN, L_IN) PyTorch NCL input; slab = pack_wrenchnet_params(params)."""
    # layer-1 im2col with parity-split row order (pure indexing / layout plumbing, no FLOPs)
    t_order = jnp.asarray(T1_ORDER, jnp.int32)
    idx = S1 * t_order[:, None] + jnp.arange(K1, dtype=jnp.int32)[None, :]     # (7, 3)
    win = x_ncl.astype(jnp.float32)[:, :, idx]                                 # (B, C_IN, 7, 3)
    xc = jnp.transpose(win, (0, 2, 3, 1)).reshape(B, L1, K1 * C_IN)            # col = k*6+cin
    xc = jnp.concatenate([xc, jnp.zeros((B, RB - L1, K1 * C_IN), jnp.float32)], axis=1)
    x_cols = xc.reshape(NR, K1 * C_IN)                                         # (16, 18)

    vspec = pl.BlockSpec(memory_space=pltpu.MemorySpace.VMEM)
    out_pad = pl.pallas_call(
        wrenchnet_kernel,
        out_shape=jax.ShapeDtypeStruct((NR, BLK), jnp.float32),
        in_specs=[vspec, vspec],
        out_specs=vspec,
    )(x_cols, slab)                                                            # (16, 128)

    # extract the L3 valid rows per batch and apply the channel-major x.view(B, -1) flatten
    y = out_pad[:, :C3].reshape(B, RB, C3)[:, :L3, :]                          # (B, L3, C3)
    return jnp.transpose(y, (0, 2, 1)).reshape(B, C3 * L3)                     # (B, 32)


def _ref_forward(x_ncl, params):
    # pure-JAX reference with PyTorch-equivalent math (f32-exact matmuls) for checking
    w1, b1, g1, be1, w2, b2, g2, be2, w3, b3 = params
    hp = jax.lax.Precision.HIGHEST
    x = jnp.transpose(x_ncl, (0, 2, 1)).astype(jnp.float32)                    # (B, L, C)

    def conv(h, w, b, stride):
        K = w.shape[0]
        Lout = (h.shape[1] - K) // stride + 1
        cols = []
        for t in range(Lout):
            acc = jnp.zeros((h.shape[0], w.shape[2]), jnp.float32) + b
            for k in range(K):
                acc = acc + jnp.dot(h[:, stride * t + k, :], w[k], precision=hp)
            cols.append(acc)
        return jnp.stack(cols, axis=1)

    def bn(h, gamma, beta):
        mean = jnp.mean(h, axis=(0, 1), keepdims=True)
        var = jnp.mean((h - mean) ** 2, axis=(0, 1), keepdims=True)
        return (h - mean) * jax.lax.rsqrt(var + EPS) * gamma + beta

    h = bn(jnp.maximum(conv(x, w1, b1, S1), 0.0), g1, be1)
    h = bn(jnp.maximum(conv(h, w2, b2, S2), 0.0), g2, be2)
    h = conv(h, w3, b3, S3)
    return jnp.transpose(h, (0, 2, 1)).reshape(B, C3 * L3)


def _bf16_exact(a):
    # round test data to bf16-representable f32 so any MXU input rounding is lossless and the
    # kernel/reference comparison checks the layout/shift algebra at ~f32 accuracy.
    return a.astype(jnp.bfloat16).astype(jnp.float32)


def make_params(key):
    ks = jax.random.split(key, 10)

    def rnd(k, shape, scale):
        return _bf16_exact(scale * jax.random.normal(k, shape, jnp.float32))

    w1 = rnd(ks[0], (K1, C_IN, C1), 0.20)
    b1 = rnd(ks[1], (1, C1), 0.10)
    g1 = _bf16_exact(1.0 + 0.10 * jax.random.normal(ks[2], (1, C1), jnp.float32))
    be1 = rnd(ks[3], (1, C1), 0.05)
    w2 = rnd(ks[4], (K2, C1, C2), 0.15)
    b2 = rnd(ks[5], (1, C2), 0.10)
    g2 = _bf16_exact(1.0 + 0.10 * jax.random.normal(ks[6], (1, C2), jnp.float32))
    be2 = rnd(ks[7], (1, C2), 0.05)
    w3 = rnd(ks[8], (K3, C2, C3), 0.15)
    b3 = rnd(ks[9], (1, C3), 0.10)
    return (w1, b1, g1, be1, w2, b2, g2, be2, w3, b3)


if __name__ == "__main__":
    key = jax.random.PRNGKey(0)
    k_x, k_p = jax.random.split(key)
    x = _bf16_exact(jax.random.normal(k_x, (B, C_IN, L_IN), jnp.float32))   # PyTorch NCL input
    params = make_params(k_p)
    slab = pack_wrenchnet_params(params)   # one-time repack, not in the per-call hot path

    out = jax.block_until_ready(wrenchnet_forward(x, slab))
    ref = jax.block_until_ready(_ref_forward(x, params))

    assert out.shape == (B, C3 * L3), out.shape
    np.testing.assert_allclose(np.asarray(out), np.asarray(ref), rtol=1e-4, atol=1e-4)
    print("KERNEL_OK")
</pallas_src>

<mosaic_0001>
module attributes {stable_mosaic.version = 11 : i64} {
  func.func @wrenchnet_kernel(%arg0: memref<16x18xf32, #tpu.memory_space<vmem>>, %arg1: memref<88x384xf32, #tpu.memory_space<vmem>>, %arg2: memref<16x128xf32, #tpu.memory_space<vmem>>) attributes {dimension_semantics = [], scalar_prefetch = 0 : i64, scratch_operands = 0 : i64, tpu.core_type = #tpu.core_type<tc>} {
    %0 = tpu.iota {dimensions = array<i32: 0>} : vector<16x1xi32>
    %c8_i32 = arith.constant 8 : i32
    %1 = vector.broadcast %c8_i32 : i32 to vector<16x1xi32>
    %2 = arith.remsi %0, %1 : vector<16x1xi32>
    %c7_i32 = arith.constant 7 : i32
    %3 = vector.broadcast %c7_i32 : i32 to vector<16x1xi32>
    %4 = arith.cmpi slt, %2, %3 : vector<16x1xi32>
    %5 = arith.extui %4 : vector<16x1xi1> to vector<16x1xi32>
    %6 = arith.sitofp %5 : vector<16x1xi32> to vector<16x1xf32>
    %c3_i32 = arith.constant 3 : i32
    %7 = vector.broadcast %c3_i32 : i32 to vector<16x1xi32>
    %8 = arith.cmpi slt, %2, %7 : vector<16x1xi32>
    %9 = arith.extui %8 : vector<16x1xi1> to vector<16x1xi32>
    %10 = arith.sitofp %9 : vector<16x1xi32> to vector<16x1xf32>
    %c0 = arith.constant 0 : index
    %c0_0 = arith.constant 0 : index
    %11 = vector.load %arg1[%c0, %c0_0] : memref<88x384xf32, #tpu.memory_space<vmem>>, vector<18x20xf32>
    %c24 = arith.constant 24 : index
    %c0_1 = arith.constant 0 : index
    %12 = vector.load %arg1[%c24, %c0_1] : memref<88x384xf32, #tpu.memory_space<vmem>>, vector<20x384xf32>
    %c48 = arith.constant 48 : index
    %c0_2 = arith.constant 0 : index
    %13 = vector.load %arg1[%c48, %c0_2] : memref<88x384xf32, #tpu.memory_space<vmem>>, vector<30x256xf32>
    %c80 = arith.constant 80 : index
    %c0_3 = arith.constant 0 : index
    %14 = vector.load %arg1[%c80, %c0_3] : memref<88x384xf32, #tpu.memory_space<vmem>>, vector<1x20xf32>
    %c81 = arith.constant 81 : index
    %c0_4 = arith.constant 0 : index
    %15 = vector.load %arg1[%c81, %c0_4] : memref<88x384xf32, #tpu.memory_space<vmem>>, vector<1x20xf32>
    %c82 = arith.constant 82 : index
    %c0_5 = arith.constant 0 : index
    %16 = vector.load %arg1[%c82, %c0_5] : memref<88x384xf32, #tpu.memory_space<vmem>>, vector<1x20xf32>
    %c83 = arith.constant 83 : index
    %c0_6 = arith.constant 0 : index
    %17 = vector.load %arg1[%c83, %c0_6] : memref<88x384xf32, #tpu.memory_space<vmem>>, vector<1x128xf32>
    %c84 = arith.constant 84 : index
    %c0_7 = arith.constant 0 : index
    %18 = vector.load %arg1[%c84, %c0_7] : memref<88x384xf32, #tpu.memory_space<vmem>>, vector<1x128xf32>
    %c85 = arith.constant 85 : index
    %c0_8 = arith.constant 0 : index
    %19 = vector.load %arg1[%c85, %c0_8] : memref<88x384xf32, #tpu.memory_space<vmem>>, vector<1x128xf32>
    %c86 = arith.constant 86 : index
    %c0_9 = arith.constant 0 : index
    %20 = vector.load %arg1[%c86, %c0_9] : memref<88x384xf32, #tpu.memory_space<vmem>>, vector<1x128xf32>
    %c0_10 = arith.constant 0 : index
    %c0_11 = arith.constant 0 : index
    %21 = vector.load %arg0[%c0_10, %c0_11] : memref<16x18xf32, #tpu.memory_space<vmem>>, vector<16x18xf32>
    %cst = arith.constant dense<0.000000e+00> : vector<16x20xf32>
    %22 = tpu.matmul %21, %11, %cst {dimension_numbers = #tpu.dot_dimension_numbers<[1], [0], [0], [1], [0, 0, 1, 1], [], []>} : vector<16x18xf32>, vector<18x20xf32>, vector<16x20xf32> -> vector<16x20xf32>
    %23 = vector.broadcast %14 : vector<1x20xf32> to vector<16x20xf32>
    %24 = arith.addf %22, %23 : vector<16x20xf32>
    %cst_12 = arith.constant 0.000000e+00 : f32
    %25 = vector.broadcast %cst_12 : f32 to vector<16x20xf32>
    %26 = arith.maximumf %24, %25 : vector<16x20xf32>
    %27 = vector.broadcast %6 : vector<16x1xf32> to vector<16x20xf32>
    %28 = arith.mulf %26, %27 : vector<16x20xf32>
    %cst_13 = arith.constant dense<0.000000e+00> : vector<20xf32>
    %29 = vector.multi_reduction <add>, %28, %cst_13 [0] : vector<16x20xf32> to vector<20xf32>
    %30 = vector.shape_cast %29 : vector<20xf32> to vector<1x20xf32>
    %cst_14 = arith.constant 0.0714285746 : f32
    %31 = vector.broadcast %cst_14 : f32 to vector<1x20xf32>
    %32 = arith.mulf %30, %31 : vector<1x20xf32>
    %33 = vector.broadcast %32 : vector<1x20xf32> to vector<16x20xf32>
    %34 = arith.subf %26, %33 : vector<16x20xf32>
    %35 = vector.broadcast %6 : vector<16x1xf32> to vector<16x20xf32>
    %36 = arith.mulf %34, %35 : vector<16x20xf32>
    %37 = arith.mulf %36, %36 : vector<16x20xf32>
    %cst_15 = arith.constant dense<0.000000e+00> : vector<20xf32>
    %38 = vector.multi_reduction <add>, %37, %cst_15 [0] : vector<16x20xf32> to vector<20xf32>
    %39 = vector.shape_cast %38 : vector<20xf32> to vector<1x20xf32>
    %cst_16 = arith.constant 0.0714285746 : f32
    %40 = vector.broadcast %cst_16 : f32 to vector<1x20xf32>
    %41 = arith.mulf %39, %40 : vector<1x20xf32>
    %42 = vector.broadcast %32 : vector<1x20xf32> to vector<16x20xf32>
    %43 = arith.subf %26, %42 : vector<16x20xf32>
    %cst_17 = arith.constant 9.99999974E-6 : f32
    %44 = vector.broadcast %cst_17 : f32 to vector<1x20xf32>
    %45 = arith.addf %41, %44 : vector<1x20xf32>
    %46 = math.rsqrt %45 : vector<1x20xf32>
    %47 = vector.broadcast %46 : vector<1x20xf32> to vector<16x20xf32>
    %48 = arith.mulf %43, %47 : vector<16x20xf32>
    %49 = vector.broadcast %15 : vector<1x20xf32> to vector<16x20xf32>
    %50 = arith.mulf %48, %49 : vector<16x20xf32>
    %51 = vector.broadcast %16 : vector<1x20xf32> to vector<16x20xf32>
    %52 = arith.addf %50, %51 : vector<16x20xf32>
    %cst_18 = arith.constant dense<0.000000e+00> : vector<16x384xf32>
    %53 = tpu.matmul %52, %12, %cst_18 {dimension_numbers = #tpu.dot_dimension_numbers<[1], [0], [0], [1], [0, 0, 1, 1], [], []>} : vector<16x20xf32>, vector<20x384xf32>, vector<16x384xf32> -> vector<16x384xf32>
    %54 = vector.extract_strided_slice %53 {offsets = [0, 0], sizes = [16, 128], strides = [1, 1]} : vector<16x384xf32> to vector<16x128xf32>
    %55 = vector.extract_strided_slice %53 {offsets = [0, 128], sizes = [16, 128], strides = [1, 1]} : vector<16x384xf32> to vector<16x128xf32>
    %56 = vector.extract_strided_slice %55 {offsets = [4, 0], sizes = [12, 128], strides = [1, 1]} : vector<16x128xf32> to vector<12x128xf32>
    %57 = vector.extract_strided_slice %55 {offsets = [0, 0], sizes = [4, 128], strides = [1, 1]} : vector<16x128xf32> to vector<4x128xf32>
    %58 = tpu.concatenate %56, %57 in 0 : vector<12x128xf32>, vector<4x128xf32> -> vector<16x128xf32>
    %59 = arith.addf %54, %58 : vector<16x128xf32>
    %60 = vector.extract_strided_slice %53 {offsets = [0, 256], sizes = [16, 128], strides = [1, 1]} : vector<16x384xf32> to vector<16x128xf32>
    %61 = vector.extract_strided_slice %60 {offsets = [1, 0], sizes = [15, 128], strides = [1, 1]} : vector<16x128xf32> to vector<15x128xf32>
    %62 = vector.extract_strided_slice %60 {offsets = [0, 0], sizes = [1, 128], strides = [1, 1]} : vector<16x128xf32> to vector<1x128xf32>
    %63 = tpu.concatenate %61, %62 in 0 : vector<15x128xf32>, vector<1x128xf32> -> vector<16x128xf32>
    %64 = arith.addf %59, %63 : vector<16x128xf32>
    %65 = vector.broadcast %17 : vector<1x128xf32> to vector<16x128xf32>
    %66 = arith.addf %64, %65 : vector<16x128xf32>
    %cst_19 = arith.constant 0.000000e+00 : f32
    %67 = vector.broadcast %cst_19 : f32 to vector<16x128xf32>
    %68 = arith.maximumf %66, %67 : vector<16x128xf32>
    %69 = vector.broadcast %10 : vector<16x1xf32> to vector<16x128xf32>
    %70 = arith.mulf %68, %69 : vector<16x128xf32>
    %cst_20 = arith.constant dense<0.000000e+00> : vector<128xf32>
    %71 = vector.multi_reduction <add>, %70, %cst_20 [0] : vector<16x128xf32> to vector<128xf32>
    %72 = vector.shape_cast %71 : vector<128xf32> to vector<1x128xf32>
    %cst_21 = arith.constant 0.166666672 : f32
    %73 = vector.broadcast %cst_21 : f32 to vector<1x128xf32>
    %74 = arith.mulf %72, %73 : vector<1x128xf32>
    %75 = vector.broadcast %74 : vector<1x128xf32> to vector<16x128xf32>
    %76 = arith.subf %68, %75 : vector<16x128xf32>
    %77 = vector.broadcast %10 : vector<16x1xf32> to vector<16x128xf32>
    %78 = arith.mulf %76, %77 : vector<16x128xf32>
    %79 = arith.mulf %78, %78 : vector<16x128xf32>
    %cst_22 = arith.constant dense<0.000000e+00> : vector<128xf32>
    %80 = vector.multi_reduction <add>, %79, %cst_22 [0] : vector<16x128xf32> to vector<128xf32>
    %81 = vector.shape_cast %80 : vector<128xf32> to vector<1x128xf32>
    %cst_23 = arith.constant 0.166666672 : f32
    %82 = vector.broadcast %cst_23 : f32 to vector<1x128xf32>
    %83 = arith.mulf %81, %82 : vector<1x128xf32>
    %84 = vector.broadcast %74 : vector<1x128xf32> to vector<16x128xf32>
    %85 = arith.subf %68, %84 : vector<16x128xf32>
    %cst_24 = arith.constant 9.99999974E-6 : f32
    %86 = vector.broadcast %cst_24 : f32 to vector<1x128xf32>
    %87 = arith.addf %83, %86 : vector<1x128xf32>
    %88 = math.rsqrt %87 : vector<1x128xf32>
    %89 = vector.broadcast %88 : vector<1x128xf32> to vector<16x128xf32>
    %90 = arith.mulf %85, %89 : vector<16x128xf32>
    %91 = vector.broadcast %18 : vector<1x128xf32> to vector<16x128xf32>
    %92 = arith.mulf %90, %91 : vector<16x128xf32>
    %93 = vector.broadcast %19 : vector<1x128xf32> to vector<16x128xf32>
    %94 = arith.addf %92, %93 : vector<16x128xf32>
    %95 = vector.extract_strided_slice %94 {offsets = [0, 0], sizes = [16, 30], strides = [1, 1]} : vector<16x128xf32> to vector<16x30xf32>
    %cst_25 = arith.constant dense<0.000000e+00> : vector<16x256xf32>
    %96 = tpu.matmul %95, %13, %cst_25 {dimension_numbers = #tpu.dot_dimension_numbers<[1], [0], [0], [1], [0, 0, 1, 1], [], []>} : vector<16x30xf32>, vector<30x256xf32>, vector<16x256xf32> -> vector<16x256xf32>
    %97 = vector.extract_strided_slice %96 {offsets = [0, 0], sizes = [16, 128], strides = [1, 1]} : vector<16x256xf32> to vector<16x128xf32>
    %98 = vector.extract_strided_slice %96 {offsets = [0, 128], sizes = [16, 128], strides = [1, 1]} : vector<16x256xf32> to vector<16x128xf32>
    %99 = vector.extract_strided_slice %98 {offsets = [1, 0], sizes = [15, 128], strides = [1, 1]} : vector<16x128xf32> to vector<15x128xf32>
    %100 = vector.extract_strided_slice %98 {offsets = [0, 0], sizes = [1, 128], strides = [1, 1]} : vector<16x128xf32> to vector<1x128xf32>
    %101 = tpu.concatenate %99, %100 in 0 : vector<15x128xf32>, vector<1x128xf32> -> vector<16x128xf32>
    %102 = arith.addf %97, %101 : vector<16x128xf32>
    %103 = vector.broadcast %20 : vector<1x128xf32> to vector<16x128xf32>
    %104 = arith.addf %102, %103 : vector<16x128xf32>
    %c0_26 = arith.constant 0 : index
    %c0_27 = arith.constant 0 : index
    %105 = vector.load %arg2[%c0_26, %c0_27] : memref<16x128xf32, #tpu.memory_space<vmem>>, vector<16x128xf32>
    tpu.vector_store %arg2[%c0_26, %c0_27], %104 {strides = array<i32>} : memref<16x128xf32, #tpu.memory_space<vmem>>, vector<16x128xf32>,
    return
  }
}

</mosaic_0001>

<llo_original>
// kernel: wrenchnet_forward.1
$region0: #{wrenchnet_forward.1}
  #allocation0 [shape = 'u32[]', space=smem, size = 0x4, offset = 0x4, fixed_abs, tag = 'smem constant byte address 0x4 - core index']
  #allocation1 [shape = 'u32[72,128]{1,0:T(1,128)}', space=vmem, size = 0x9000, scoped, tag = 'internal scratch']
  %s0 = inlined_call_operand.vmem [shape: f32[16,18], index: 0, kind: input, shape index: {}]
  %s1 = inlined_call_operand.vmem [shape: f32[88,384], index: 1, kind: input, shape index: {}]
  %s2 = inlined_call_operand.vmem [shape: f32[16,128], index: 2, kind: output, shape index: {}]
  %s3 = sld [smem:[#allocation0]]
  $region18: #{wrenchnet_forward.1} parent=0
    _
  %s5 = ssub.s32 1, %s3
  %s6 = scalar_select 0, %s5, %s3
  // Predicated region
  $region2: #{wrenchnet_forward.1} parent=0 // pred_check
    _
  $region3: #{wrenchnet_forward.1} parent=0 // pred_check_branch
    %8 = sbr.rel (0) target = $region5
  $region4: #{wrenchnet_forward.1} parent=0 // pred_region
    _
  $region5: #{wrenchnet_forward.1} parent=0 // pred_fallthru
    _
  // Predicated region
  $region6: #{wrenchnet_forward.1} parent=0 // pred_check
    _
  $region7: #{wrenchnet_forward.1} parent=0 // pred_check_branch
    %10 = sbr.rel (0) target = $region9
  $region8: #{wrenchnet_forward.1} parent=0 // pred_region
    _
  $region9: #{wrenchnet_forward.1} parent=0 // pred_fallthru
    _
  %v11 = vlaneseq
  %v12 = vshrl.u32 %v11, 7
  %v13 = vadd.s32 %v12, 8
  %vm14 = vcmp.lt.s32.totalorder %v12, 0
  %v15 = vsub.s32 0, %v12
  %v16 = vsel %vm14, %v15, %v12
  %v17 = vshrl.u32 %v16, 3
  %v18 = vand.u32 %v16, 7
  %v19 = vsub.s32 0, %v18
  %v20 = vsel %vm14, %v19, %v18
  %vm21 = vcmp.lt.s32.totalorder %v13, 0
  %v22 = vsub.s32 0, %v13
  %v23 = vsel %vm21, %v22, %v13
  %v24 = vshrl.u32 %v23, 3
  %v25 = vand.u32 %v23, 7
  %v26 = vsub.s32 0, %v25
  %v27 = vsel %vm21, %v26, %v25
  %vm28 = vcmp.lt.s32.totalorder %v20, 7
  %vm29 = vcmp.lt.s32.totalorder %v27, 7
  %v30 = vsel %vm28, 1, 0
  %v31 = vsel %vm29, 1, 0
  %v32 = vcvt.s32.f32 %v30
  %v33 = vcvt.s32.f32 %v31
  %vm34 = vcmp.lt.s32.totalorder %v20, 3
  %vm35 = vcmp.lt.s32.totalorder %v27, 3
  %v36 = vsel %vm34, 1, 0
  %v37 = vsel %vm35, 1, 0
  %v38 = vcvt.s32.f32 %v36
  %v39 = vcvt.s32.f32 %v37
  %v40 = vld [vmem:[%s1] sm:$0xff]
  %v41 = vld [vmem:[%s1 + $0x18] sm:$0xff]
  %v42 = vld [vmem:[%s1 + $0x30] sm:$0x3]
  %v43 = vld [vmem:[%s1 + $0x48] sm:$0xff]
  %v44 = vld [vmem:[%s1 + $0x50] sm:$0xff]
  %v45 = vld [vmem:[%s1 + $0x58] sm:$0xff]
  %v46 = vld [vmem:[%s1 + $0x60] sm:$0xff]
  %v47 = vld [vmem:[%s1 + $0x68] sm:$0xff]
  %v48 = vld [vmem:[%s1 + $0x70] sm:$0xff]
  %v49 = vld [vmem:[%s1 + $0x78] sm:$0xf]
  %v50 = vld [vmem:[%s1 + $0x80] sm:$0xf]
  %v51 = vld [vmem:[%s1 + $0x88] sm:$0xf]
  %v52 = vld [vmem:[%s1 + $0x90] sm:$0xff]
  %v53 = vld [vmem:[%s1 + $0x98] sm:$0xff]
  %v54 = vld [vmem:[%s1 + $0xa8] sm:$0xff]
  %v55 = vld [vmem:[%s1 + $0xb0] sm:$0xff]
  %v56 = vld [vmem:[%s1 + $0xc0] sm:$0xff]
  %v57 = vld [vmem:[%s1 + $0xc8] sm:$0xff]
  %v58 = vld [vmem:[%s1 + $0xd8] sm:$0x3f]
  %v59 = vld [vmem:[%s1 + $0xe0] sm:$0x3f]
  %v60 = vld [vmem:[%s1 + $0xf0] ss:$0 sm:$0xff]
  %v61 = vld [vmem:[%s1 + $0xf1] ss:$0 sm:$0xff]
  %v62 = vld [vmem:[%s1 + $0xf2] ss:$0 sm:$0xff]
  %v63 = vld [vmem:[%s1 + $0xf3] ss:$0 sm:$0xff]
  %v64 = vld [vmem:[%s1 + $0xf4] ss:$0 sm:$0xff]
  %v65 = vld [vmem:[%s1 + $0xf5] ss:$0 sm:$0xff]
  %v66 = vld [vmem:[%s1 + $0xf6] ss:$0 sm:$0xff]
  %v67 = vld [vmem:[%s0] sm:$0xff]
  %v68 = vld [vmem:[%s0 + $0x8] sm:$0xff]
  %vm69 = vcmask 146432
  %v71 = vsel %vm69, %v67, 0
  %v74 = vsel %vm69, %v68, 0
  %vm76 = vcmask 1041408
  %v78 = vsel %vm76, %v42, 0
  %80 = vmatpush.msra.mxu0 0.0
  %81 = vmatpush.msra.mxu0 0.0
  %82 = vmatpush.msra.mxu0 0.0
  %83 = vmatpush.msra.mxu0 0.0
  %84 = vmatpush.msra.mxu0 0.0
  %85 = vmatpush.msra.mxu0 0.0
  %86 = vmatpush.msra.mxu0 0.0
  %87 = vmatpush.msra.mxu0 0.0
  %88 = vmatpush.msra.mxu0 0.0
  %89 = vmatpush.msra.mxu0 0.0
  %90 = vmatpush.msra.mxu0 0.0
  %91 = vmatpush.msra.mxu0 0.0
  %92 = vmatpush.msra.mxu0 0.0
  %93 = vmatpush.msra.mxu0 %v78
  %94 = vmatpush.msra.mxu0 %v41
  %95 = vmatpush.msra.mxu0 %v40
  %96 = vmatmul.f32.gmra.mxu0 %v71
  %v97 = vpop.f32.mrf.mxu0
  %v98 = vadd.f32 %v60, %v97
  %99 = vmatmul.f32.gmra.mxu0 %v74
  %v100 = vpop.f32.mrf.mxu0
  %v101 = vadd.f32 %v60, %v100
  %102 = vdwg.mxu0
  %v103 = vmax.f32 %v98, 0.0
  %v104 = vmax.f32 %v101, 0.0
  %v105 = vmul.f32 %v103, %v32
  %v106 = vmul.f32 %v104, %v33
  %vm107 = vcmask 162816
  %v108 = vsel %vm107, %v105, 0.0
  %v109 = vsel %vm107, %v106, 0.0
  %v110 = vadd.f32 %v108, %v109
  %v111 = vrot.slane %v110, 4
  %v112 = vadd.f32 %v110, %v111
  %v113 = vrot.slane %v112, 2
  %v114 = vadd.f32 %v112, %v113
  %v115 = vrot.slane %v114, 1
  %v116 = vadd.f32 %v114, %v115
  %v117 = vmul.f32 %v116, 0.071428575
  %v118 = vsub.f32 %v103, %v117
  %v119 = vsub.f32 %v104, %v117
  %v120 = vmul.f32 %v118, %v32
  %v121 = vmul.f32 %v119, %v33
  %v122 = vmul.f32 %v120, %v120
  %v123 = vmul.f32 %v121, %v121
  %v124 = vsel %vm107, %v122, 0.0
  %v125 = vsel %vm107, %v123, 0.0
  %v126 = vadd.f32 %v124, %v125
  %v127 = vrot.slane %v126, 4
  %v128 = vadd.f32 %v126, %v127
  %v129 = vrot.slane %v128, 2
  %v130 = vadd.f32 %v128, %v129
  %v131 = vrot.slane %v130, 1
  %v132 = vadd.f32 %v130, %v131
  %v133 = vmul.f32 %v132, 0.071428575
  %v134 = vadd.f32 %v133, 1e-05
  %v135 = vrsqrt.pop %v134
  %v136 = vmul.f32 %v135, %v134
  %v137 = vmul.f32 %v136, %v135
  %v138 = vmul.f32 0.5, %v137
  %v139 = vsub.f32 1.5, %v138
  %v140 = vmul.f32 %v135, %v139
  %vm141 = vweird.f32 %v134
  %vm142 = vweird.f32 %v135
  %vm143 = vmor %vm141, %vm142
  %v144 = vsel %vm143, %v135, %v140
  %v145 = vmul.f32 %v118, %v144
  %v146 = vmul.f32 %v119, %v144
  %v147 = vmul.f32 %v145, %v61
  %v148 = vmul.f32 %v146, %v61
  %v149 = vadd.f32 %v147, %v62
  %v150 = vadd.f32 %v148, %v62
  %v152 = vsel %vm107, %v149, 0
  %v155 = vsel %vm107, %v150, 0
  %vm157 = vcmask 1043456
  %v159 = vsel %vm157, %v49, 0
  %v162 = vsel %vm157, %v50, 0
  %v165 = vsel %vm157, %v51, 0
  %167 = vmatpush.msra.mxu0 0.0
  %168 = vmatpush.msra.mxu0 0.0
  %169 = vmatpush.msra.mxu0 0.0
  %170 = vmatpush.msra.mxu0 0.0
  %171 = vmatpush.msra.mxu0 0.0
  %172 = vmatpush.msra.mxu0 0.0
  %173 = vmatpush.msra.mxu0 0.0
  %174 = vmatpush.msra.mxu0 0.0
  %175 = vmatpush.msra.mxu0 0.0
  %176 = vmatpush.msra.mxu0 0.0
  %177 = vmatpush.msra.mxu0 0.0
  %178 = vmatpush.msra.mxu0 0.0
  %179 = vmatpush.msra.mxu0 0.0
  %180 = vmatpush.msra.mxu0 %v159
  %181 = vmatpush.msra.mxu0 %v46
  %182 = vmatpush.msra.mxu0 %v43
  %183 = vmatmul.f32.gmra.mxu0 %v152
  %v184 = vpop.f32.mrf.mxu0
  %v185 = vadd.f32 0.0, %v184
  %186 = vmatmul.f32.gmra.mxu0 %v155
  %v187 = vpop.f32.mrf.mxu0
  %v188 = vadd.f32 0.0, %v187
  %189 = vdwg.mxu0
  %190 = vmatpush.msra.mxu0 0.0
  %191 = vmatpush.msra.mxu0 0.0
  %192 = vmatpush.msra.mxu0 0.0
  %193 = vmatpush.msra.mxu0 0.0
  %194 = vmatpush.msra.mxu0 0.0
  %195 = vmatpush.msra.mxu0 0.0
  %196 = vmatpush.msra.mxu0 0.0
  %197 = vmatpush.msra.mxu0 0.0
  %198 = vmatpush.msra.mxu0 0.0
  %199 = vmatpush.msra.mxu0 0.0
  %200 = vmatpush.msra.mxu0 0.0
  %201 = vmatpush.msra.mxu0 0.0
  %202 = vmatpush.msra.mxu0 0.0
  %203 = vmatpush.msra.mxu0 %v162
  %204 = vmatpush.msra.mxu0 %v47
  %205 = vmatpush.msra.mxu0 %v44
  %206 = vmatmul.f32.gmra.mxu0 %v152
  %v207 = vpop.f32.mrf.mxu0
  %v208 = vadd.f32 0.0, %v207
  %209 = vmatmul.f32.gmra.mxu0 %v155
  %v210 = vpop.f32.mrf.mxu0
  %v211 = vadd.f32 0.0, %v210
  %212 = vdwg.mxu0
  %213 = vmatpush.msra.mxu0 0.0
  %214 = vmatpush.msra.mxu0 0.0
  %215 = vmatpush.msra.mxu0 0.0
  %216 = vmatpush.msra.mxu0 0.0
  %217 = vmatpush.msra.mxu0 0.0
  %218 = vmatpush.msra.mxu0 0.0
  %219 = vmatpush.msra.mxu0 0.0
  %220 = vmatpush.msra.mxu0 0.0
  %221 = vmatpush.msra.mxu0 0.0
  %222 = vmatpush.msra.mxu0 0.0
  %223 = vmatpush.msra.mxu0 0.0
  %224 = vmatpush.msra.mxu0 0.0
  %225 = vmatpush.msra.mxu0 0.0
  %226 = vmatpush.msra.mxu0 %v165
  %227 = vmatpush.msra.mxu0 %v48
  %228 = vmatpush.msra.mxu0 %v45
  %229 = vmatmul.f32.gmra.mxu0 %v152
  %v230 = vpop.f32.mrf.mxu0
  %v231 = vadd.f32 0.0, %v230
  %232 = vmatmul.f32.gmra.mxu0 %v155
  %v233 = vpop.f32.mrf.mxu0
  %v234 = vadd.f32 0.0, %v233
  %235 = vdwg.mxu0
  %v238 = vrot.slane %v208, 4
  %v239 = vrot.slane %v211, 4
  %v240 = vsel %vm157, %v238, %v239
  %v244 = vsel %vm157, %v239, %v238
  %v245 = vadd.f32 %v185, %v240
  %v246 = vadd.f32 %v188, %v244
  %vm249 = vcmask 1046528
  %v250 = vrot.slane %v231, 1
  %v251 = vrot.slane %v234, 1
  %v252 = vsel %vm249, %v250, %v251
  %v256 = vsel %vm249, %v251, %v250
  %v257 = vadd.f32 %v245, %v252
  %v258 = vadd.f32 %v246, %v256
  %v259 = vadd.f32 %v257, %v63
  %v260 = vadd.f32 %v258, %v63
  %v261 = vmax.f32 %v259, 0.0
  %v262 = vmax.f32 %v260, 0.0
  %v263 = vmul.f32 %v261, %v38
  %v264 = vmul.f32 %v262, %v39
  %v265 = vadd.f32 %v263, %v264
  %v266 = vrot.slane %v265, 4
  %v267 = vadd.f32 %v265, %v266
  %v268 = vrot.slane %v267, 2
  %v269 = vadd.f32 %v267, %v268
  %v270 = vrot.slane %v269, 1
  %v271 = vadd.f32 %v269, %v270
  %v272 = vmul.f32 %v271, 0.16666667
  %v273 = vsub.f32 %v261, %v272
  %v274 = vsub.f32 %v262, %v272
  %v275 = vmul.f32 %v273, %v38
  %v276 = vmul.f32 %v274, %v39
  %v277 = vmul.f32 %v275, %v275
  %v278 = vmul.f32 %v276, %v276
  %v279 = vadd.f32 %v277, %v278
  %v280 = vrot.slane %v279, 4
  %v281 = vadd.f32 %v279, %v280
  %v282 = vrot.slane %v281, 2
  %v283 = vadd.f32 %v281, %v282
  %v284 = vrot.slane %v283, 1
  %v285 = vadd.f32 %v283, %v284
  %v286 = vmul.f32 %v285, 0.16666667
  %v287 = vadd.f32 %v286, 1e-05
  %v288 = vrsqrt.pop %v287
  %v289 = vmul.f32 %v288, %v287
  %v290 = vmul.f32 %v289, %v288
  %v291 = vmul.f32 0.5, %v290
  %v292 = vsub.f32 1.5, %v291
  %v293 = vmul.f32 %v288, %v292
  %vm294 = vweird.f32 %v287
  %vm295 = vweird.f32 %v288
  %vm296 = vmor %vm294, %vm295
  %v297 = vsel %vm296, %v288, %v293
  %v298 = vmul.f32 %v273, %v297
  %v299 = vmul.f32 %v274, %v297
  %v300 = vmul.f32 %v298, %v64
  %v301 = vmul.f32 %v299, %v64
  %v302 = vadd.f32 %v300, %v65
  %v303 = vadd.f32 %v301, %v65
  %vm304 = vcmask 244736
  %v306 = vsel %vm304, %v302, 0
  %v309 = vsel %vm304, %v303, 0
  %vm311 = vcmask 1045504
  %v313 = vsel %vm311, %v58, 0
  %v316 = vsel %vm311, %v59, 0
  %318 = vmatpush.msra.mxu0 0.0
  %319 = vmatpush.msra.mxu0 0.0
  %320 = vmatpush.msra.mxu0 0.0
  %321 = vmatpush.msra.mxu0 0.0
  %322 = vmatpush.msra.mxu0 0.0
  %323 = vmatpush.msra.mxu0 0.0
  %324 = vmatpush.msra.mxu0 0.0
  %325 = vmatpush.msra.mxu0 0.0
  %326 = vmatpush.msra.mxu0 0.0
  %327 = vmatpush.msra.mxu0 0.0
  %328 = vmatpush.msra.mxu0 0.0
  %329 = vmatpush.msra.mxu0 0.0
  %330 = vmatpush.msra.mxu0 %v313
  %331 = vmatpush.msra.mxu0 %v56
  %332 = vmatpush.msra.mxu0 %v54
  %333 = vmatpush.msra.mxu0 %v52
  %334 = vmatmul.f32.gmra.mxu0 %v306
  %v335 = vpop.f32.mrf.mxu0
  %v336 = vadd.f32 0.0, %v335
  %337 = vmatmul.f32.gmra.mxu0 %v309
  %v338 = vpop.f32.mrf.mxu0
  %v339 = vadd.f32 0.0, %v338
  %340 = vdwg.mxu0
  %341 = vmatpush.msra.mxu0 0.0
  %342 = vmatpush.msra.mxu0 0.0
  %343 = vmatpush.msra.mxu0 0.0
  %344 = vmatpush.msra.mxu0 0.0
  %345 = vmatpush.msra.mxu0 0.0
  %346 = vmatpush.msra.mxu0 0.0
  %347 = vmatpush.msra.mxu0 0.0
  %348 = vmatpush.msra.mxu0 0.0
  %349 = vmatpush.msra.mxu0 0.0
  %350 = vmatpush.msra.mxu0 0.0
  %351 = vmatpush.msra.mxu0 0.0
  %352 = vmatpush.msra.mxu0 0.0
  %353 = vmatpush.msra.mxu0 %v316
  %354 = vmatpush.msra.mxu0 %v57
  %355 = vmatpush.msra.mxu0 %v55
  %356 = vmatpush.msra.mxu0 %v53
  %357 = vmatmul.f32.gmra.mxu0 %v306
  %v358 = vpop.f32.mrf.mxu0
  %v359 = vadd.f32 0.0, %v358
  %360 = vmatmul.f32.gmra.mxu0 %v309
  %v361 = vpop.f32.mrf.mxu0
  %v362 = vadd.f32 0.0, %v361
  %363 = vdwg.mxu0
  %v366 = vrot.slane %v359, 1
  %v367 = vrot.slane %v362, 1
  %v368 = vsel %vm249, %v366, %v367
  %v372 = vsel %vm249, %v367, %v366
  %v373 = vadd.f32 %v336, %v368
  %v374 = vadd.f32 %v339, %v372
  %v375 = vadd.f32 %v373, %v66
  %v376 = vadd.f32 %v374, %v66
  %377 = vst [vmem:[%s2] sm:$0xff] %v375
  %378 = vst [vmem:[%s2 + $0x8] sm:$0xff] %v376
  // Predicated region
  $region10: #{wrenchnet_forward.1} parent=0 // pred_check
    _
  $region11: #{wrenchnet_forward.1} parent=0 // pred_check_branch
    %380 = sbr.rel (0) target = $region13
  $region12: #{wrenchnet_forward.1} parent=0 // pred_region
    _
  $region13: #{wrenchnet_forward.1} parent=0 // pred_fallthru
    _
  // Predicated region
  $region14: #{wrenchnet_forward.1} parent=0 // pred_check
    _
  $region15: #{wrenchnet_forward.1} parent=0 // pred_check_branch
    %382 = sbr.rel (0) target = $region17
  $region16: #{wrenchnet_forward.1} parent=0 // pred_region
    _
  $region17: #{wrenchnet_forward.1} parent=0 // pred_fallthru
    _

</llo_original>
